<compile_context>
chip_gen: v5e
topology: v5e:2x2
jax: 0.10.0
libtpu: 0.0.40
codegen_flags: <defaults>
</compile_context>

<pallas_src>
import functools

import jax
import jax.numpy as jnp
from jax.experimental import pallas as pl
from jax.experimental.pallas import tpu as pltpu

NUM_KERNELS = 8
_LOG2E = 1.4426950408889634


def _round_up(x, m):
    return ((x + m - 1) // m) * m


def easymkl_kernel(xt_ref, xv_ref, alpha_ref, nsig2_ref, w_ref, b_ref, y_ref,
                   *, use_bf16_exp):
    """Grid point (i, k): validation tile i  x  train (support-vector) chunk k.

    xt_ref   : (NC, M_aug)  VMEM  -- augmented train chunk [x_j, ||x_j||^2, 1, 0...]
    xv_ref   : (M_aug, TNV) VMEM  -- augmented val tile    [-2*x_i, 1, ||x_i||^2, 0...]
    alpha_ref: (NC, 1)      VMEM  -- SVR dual coefficients for this chunk (0 on padding)
    nsig2_ref: (K,)         SMEM  -- -sigma_k * log2(e)  (exp2 bandwidths)
    w_ref    : (K,)         SMEM  -- kernel mixture weights
    b_ref    : (1,)         SMEM  -- SVR intercept
    y_ref    : (1, TNV)     VMEM  -- lane-dense output row, accumulated across k
    """
    k = pl.program_id(1)

    @pl.when(k == 0)
    def _init():
        y_ref[...] = jnp.zeros_like(y_ref)

    # Squared distance directly from the MXU: the norm terms and the -2 factor
    # are folded into the augmented operands in the wrapper.
    dist = jnp.dot(xt_ref[...], xv_ref[...],
                   preferred_element_type=jnp.float32)            # (NC, TNV)

    def _rbf(kk):
        z = nsig2_ref[kk] * dist
        if use_bf16_exp:
            # bf16 EUP path (v6e/v7x only); exp outputs are in (0, 1].
            return jnp.exp2(z.astype(jnp.bfloat16)).astype(jnp.float32)
        return jnp.exp2(z)

    # Multi-kernel RBF mixture  sum_k w_k * exp(-sigma_k * dist)   (EUP exp2)
    kmix = w_ref[0] * _rbf(0)
    for kk in range(1, NUM_KERNELS):                              # static unroll
        kmix = kmix + w_ref[kk] * _rbf(kk)

    # Partial precomputed-kernel SVR predict for this chunk:
    #   y[i] += sum_j alpha[j] * K[j, i]   (VPU multiply + sublane reduce)
    y_ref[...] += jnp.sum(kmix * alpha_ref[...], axis=0, keepdims=True)

    @pl.when(k == pl.num_programs(1) - 1)
    def _finish():
        y_ref[...] = jnp.clip(y_ref[...] + b_ref[0], -1.0, 1.0)


@functools.partial(jax.jit, static_argnames=("tile_nv", "n_chunk", "use_bf16_exp"))
def _easymkl_pallas(x_val, x_train, alpha, nsig2, weights, intercept,
                    tile_nv=256, n_chunk=1024, use_bf16_exp=False):
    """x_val: (M, N_val), x_train: (M, N) [support vectors]  ->  y_pred: (N_val,)"""
    M, N_val = x_val.shape
    _, N = x_train.shape

    # Clamp tiles to the (lane-rounded) problem size; keep 128-aligned.
    tile_nv = min(tile_nv, _round_up(N_val, 128))
    n_chunk = min(n_chunk, _round_up(N, 128))
    assert tile_nv % 128 == 0 and n_chunk % 128 == 0

    N_val_pad = _round_up(N_val, tile_nv)
    N_pad = _round_up(N, n_chunk)
    M_aug = _round_up(M + 2, 8)

    # Augmented operands so dist = xt_aug @ xv_aug is the squared distance:
    #   xt_aug[j] = [x_train[:, j], ||x_train_j||^2, 1, 0-pad]      (N, M_aug)
    #   xv_aug[:, i] = [-2 * x_val[:, i], 1, ||x_val_i||^2, 0-pad]  (M_aug, N_val)
    trn_norm = jnp.sum(x_train * x_train, axis=0)                  # (N,)
    val_norm = jnp.sum(x_val * x_val, axis=0)                      # (N_val,)

    xt_aug = jnp.concatenate(
        [x_train.T, trn_norm[:, None], jnp.ones((N, 1), jnp.float32)], axis=1)
    xv_aug = jnp.concatenate(
        [-2.0 * x_val, jnp.ones((1, N_val), jnp.float32), val_norm[None, :]],
        axis=0)

    # Zero-pad: padded train rows get alpha = 0 (contribute nothing); padded
    # val columns are all-zero (dist = 0, finite kmix) and sliced off at the end.
    xt_aug = jnp.pad(xt_aug, ((0, N_pad - N), (0, M_aug - (M + 2))))
    xv_aug = jnp.pad(xv_aug, ((0, M_aug - (M + 2)), (0, N_val_pad - N_val)))
    alpha_p = jnp.pad(alpha, (0, N_pad - N)).reshape(N_pad, 1)

    grid = (N_val_pad // tile_nv, N_pad // n_chunk)

    kernel = functools.partial(easymkl_kernel, use_bf16_exp=use_bf16_exp)

    y = pl.pallas_call(
        kernel,
        out_shape=jax.ShapeDtypeStruct((1, N_val_pad), jnp.float32),
        grid=grid,
        in_specs=[
            pl.BlockSpec((n_chunk, M_aug), lambda i, k: (k, 0)),   # xt_aug chunk
            pl.BlockSpec((M_aug, tile_nv), lambda i, k: (0, i)),   # xv_aug tile
            pl.BlockSpec((n_chunk, 1), lambda i, k: (k, 0)),       # alpha chunk
            pl.BlockSpec(memory_space=pltpu.MemorySpace.SMEM),     # -sigmas*log2e
            pl.BlockSpec(memory_space=pltpu.MemorySpace.SMEM),     # weights
            pl.BlockSpec(memory_space=pltpu.MemorySpace.SMEM),     # intercept
        ],
        # Lane-dense output row, block index constant over the reduction axis
        # -> stays VMEM resident and doubles as the accumulator.
        out_specs=pl.BlockSpec((1, tile_nv), lambda i, k: (0, i)),
        compiler_params=pltpu.CompilerParams(
            dimension_semantics=("parallel", "arbitrary"),
            # 32 MiB fits v7x's 64 MiB VMEM as well as v5e/v6e; on the 128 MiB
            # parts this may be raised to ~64 MiB for even larger tiles.
            vmem_limit_bytes=32 * 1024 * 1024),
    )(xt_aug, xv_aug, alpha_p, nsig2, weights, intercept)

    return y.reshape(-1)[:N_val]


def easymkl_forward(x_val, x_train, alpha, sigmas, weights, intercept,
                    tile_nv=256, n_chunk=1024, use_bf16_exp=False):
    """Non-jit outer wrapper: compact to support vectors, fold constants, launch."""
    x_val = jnp.asarray(x_val, jnp.float32)
    x_train = jnp.asarray(x_train, jnp.float32)
    alpha = jnp.asarray(alpha, jnp.float32).reshape(-1)

    # Support-vector compaction: only columns with alpha != 0 do any work.
    sv = jnp.nonzero(alpha != 0)[0]
    if 0 < sv.shape[0] < alpha.shape[0]:
        x_train = jnp.take(x_train, sv, axis=1)
        alpha = jnp.take(alpha, sv)

    # exp(-sigma*d) == exp2((-sigma*log2(e))*d): fold log2(e) once here.
    nsig2 = (-jnp.asarray(sigmas, jnp.float32)) * jnp.float32(_LOG2E)

    return _easymkl_pallas(
        x_val, x_train, alpha, nsig2,
        jnp.asarray(weights, jnp.float32),
        jnp.asarray(intercept, jnp.float32),
        tile_nv=tile_nv, n_chunk=n_chunk, use_bf16_exp=use_bf16_exp)


def reference_forward(x_val, x_train, alpha, sigmas, weights, intercept):
    """Plain-JAX reference mirroring the PyTorch forward."""
    ele0 = jnp.sum(x_train * x_train, axis=0)                      # (N,)
    ele2 = -2.0 * (x_val.T @ x_train)                              # (N_val, N)
    ele4 = jnp.sum(x_val * x_val, axis=0)                          # (N_val,)
    dist = ele0[None, :] + ele2 + ele4[:, None]
    kmat = jnp.zeros_like(dist)
    for k in range(NUM_KERNELS):
        kmat = kmat + weights[k] * jnp.exp(-sigmas[k] * dist)
    y = kmat @ alpha + intercept[0]
    return jnp.clip(y, -1.0, 1.0)


if __name__ == "__main__":
    # Small, module-consistent shapes: feature_dim M, N train samples, N_val val samples.
    M, N, N_VAL = 32, 128, 16

    key = jax.random.PRNGKey(0)
    k1, k2, k3 = jax.random.split(key, 3)
    x_train = jax.random.normal(k1, (M, N), dtype=jnp.float32)
    x_val = jax.random.normal(k2, (M, N_VAL), dtype=jnp.float32)
    y_train = jnp.sign(jax.random.normal(k3, (N,), dtype=jnp.float32))

    # --- deterministic "parameters" (module __init__ / opt_alpha stand-ins) ---
    sigmas = jnp.asarray([100, 10, 5, 1, 0.5, 0.1, 0.01, 0.001],
                         dtype=jnp.float32) / M                    # (8,)

    # TODO(synk): sklearn SVR fit replaced by a deterministic dual-coefficient
    # surrogate: alpha = y_train scaled into [-C, C] with a sparse support set.
    support_mask = (jnp.arange(N) % 4 == 0).astype(jnp.float32)
    alpha = (y_train * support_mask * 0.5).astype(jnp.float32)     # (N,)
    intercept = jnp.asarray([0.05], dtype=jnp.float32)             # (1,)

    # opt_alpha weight update (plain-JAX glue, init-time only):
    #   weight[k] = alpha^T exp(-sigma_k * train_gram) alpha, then normalize.
    tr_norm = jnp.sum(x_train * x_train, axis=0)
    train_gram = (tr_norm[None, :] - 2.0 * (x_train.T @ x_train) + tr_norm[:, None])
    w_list = [alpha @ jnp.exp(-sigmas[k] * train_gram) @ alpha
              for k in range(NUM_KERNELS)]
    weights = jnp.stack(w_list).astype(jnp.float32)
    weights = weights / jnp.sum(weights)                           # (8,)

    # --- run Pallas kernel ---
    y_pred = easymkl_forward(x_val, x_train, alpha, sigmas, weights, intercept)
    y_pred = jax.block_until_ready(y_pred)

    # correctness check against plain-JAX reference (f32; chunked reduction and
    # exp2-folded bandwidths differ slightly in rounding, hence the tolerance)
    y_ref = reference_forward(x_val, x_train, alpha, sigmas, weights, intercept)
    assert y_pred.shape == (N_VAL,)
    assert jnp.allclose(y_pred, y_ref, atol=1e-3, rtol=1e-3), (y_pred, y_ref)

    print("KERNEL_OK")
</pallas_src>

<mosaic_0001>
module attributes {stable_mosaic.version = 11 : i64} {
  func.func @easymkl_kernel(%arg0: i32, %arg1: i32, %arg2: memref<128x40xf32, #tpu.memory_space<vmem>>, %arg3: memref<40x128xf32, #tpu.memory_space<vmem>>, %arg4: memref<128x1xf32, #tpu.memory_space<vmem>>, %arg5: memref<8xf32, #tpu.memory_space<smem>>, %arg6: memref<8xf32, #tpu.memory_space<smem>>, %arg7: memref<1xf32, #tpu.memory_space<smem>>, %arg8: memref<1x128xf32, #tpu.memory_space<vmem>>) attributes {dimension_semantics = [#tpu.dimension_semantics<parallel>, #tpu.dimension_semantics<arbitrary>], iteration_bounds = array<i64: 1, 1>, scalar_prefetch = 0 : i64, scratch_operands = 0 : i64, tpu.core_type = #tpu.core_type<tc>, window_params = [{transform_indices = @transform_0, window_bounds = array<i64: 128, 40>}, {transform_indices = @transform_1, window_bounds = array<i64: 40, 128>}, {transform_indices = @transform_2, window_bounds = array<i64: 128, 1>}, {transform_indices = @transform_3, window_bounds = array<i64: 8>}, {transform_indices = @transform_4, window_bounds = array<i64: 8>}, {transform_indices = @transform_5, window_bounds = array<i64: 1>}, {transform_indices = @transform_6, window_bounds = array<i64: 1, 128>}]} {
    %c0_i32 = arith.constant 0 : i32
    %0 = arith.cmpi eq, %arg1, %c0_i32 : i32
    %1 = arith.extui %0 : i1 to i32
    %c0_i32_0 = arith.constant 0 : i32
    %2 = arith.cmpi ne, %1, %c0_i32_0 : i32
    scf.if %2 {
      %cst_22 = arith.constant 0.000000e+00 : f32
      %80 = vector.broadcast %cst_22 : f32 to vector<1x128xf32>
      %c0_23 = arith.constant 0 : index
      %c0_24 = arith.constant 0 : index
      %81 = vector.load %arg8[%c0_23, %c0_24] : memref<1x128xf32, #tpu.memory_space<vmem>>, vector<1x128xf32>
      tpu.vector_store %arg8[%c0_23, %c0_24], %80 {strides = array<i32>} : memref<1x128xf32, #tpu.memory_space<vmem>>, vector<1x128xf32>,
    } else {
    }
    %c0 = arith.constant 0 : index
    %c0_1 = arith.constant 0 : index
    %3 = vector.load %arg2[%c0, %c0_1] : memref<128x40xf32, #tpu.memory_space<vmem>>, vector<128x40xf32>
    %c0_2 = arith.constant 0 : index
    %c0_3 = arith.constant 0 : index
    %4 = vector.load %arg3[%c0_2, %c0_3] : memref<40x128xf32, #tpu.memory_space<vmem>>, vector<40x128xf32>
    %cst = arith.constant dense<0.000000e+00> : vector<128x128xf32>
    %5 = tpu.matmul %3, %4, %cst {dimension_numbers = #tpu.dot_dimension_numbers<[1], [0], [0], [1], [0, 0, 1, 1], [], []>} : vector<128x40xf32>, vector<40x128xf32>, vector<128x128xf32> -> vector<128x128xf32>
    %c0_4 = arith.constant 0 : index
    %6 = memref.load %arg6[%c0_4] : memref<8xf32, #tpu.memory_space<smem>>
    %c0_5 = arith.constant 0 : index
    %7 = memref.load %arg5[%c0_5] : memref<8xf32, #tpu.memory_space<smem>>
    %8 = vector.broadcast %7 : f32 to vector<128x128xf32>
    %9 = arith.mulf %8, %5 : vector<128x128xf32>
    %10 = math.exp2 %9 : vector<128x128xf32>
    %11 = vector.broadcast %6 : f32 to vector<128x128xf32>
    %12 = arith.mulf %11, %10 : vector<128x128xf32>
    %c1 = arith.constant 1 : index
    %13 = memref.load %arg6[%c1] : memref<8xf32, #tpu.memory_space<smem>>
    %c1_6 = arith.constant 1 : index
    %14 = memref.load %arg5[%c1_6] : memref<8xf32, #tpu.memory_space<smem>>
    %15 = vector.broadcast %14 : f32 to vector<128x128xf32>
    %16 = arith.mulf %15, %5 : vector<128x128xf32>
    %17 = math.exp2 %16 : vector<128x128xf32>
    %18 = vector.broadcast %13 : f32 to vector<128x128xf32>
    %19 = arith.mulf %18, %17 : vector<128x128xf32>
    %20 = arith.addf %12, %19 : vector<128x128xf32>
    %c2 = arith.constant 2 : index
    %21 = memref.load %arg6[%c2] : memref<8xf32, #tpu.memory_space<smem>>
    %c2_7 = arith.constant 2 : index
    %22 = memref.load %arg5[%c2_7] : memref<8xf32, #tpu.memory_space<smem>>
    %23 = vector.broadcast %22 : f32 to vector<128x128xf32>
    %24 = arith.mulf %23, %5 : vector<128x128xf32>
    %25 = math.exp2 %24 : vector<128x128xf32>
    %26 = vector.broadcast %21 : f32 to vector<128x128xf32>
    %27 = arith.mulf %26, %25 : vector<128x128xf32>
    %28 = arith.addf %20, %27 : vector<128x128xf32>
    %c3 = arith.constant 3 : index
    %29 = memref.load %arg6[%c3] : memref<8xf32, #tpu.memory_space<smem>>
    %c3_8 = arith.constant 3 : index
    %30 = memref.load %arg5[%c3_8] : memref<8xf32, #tpu.memory_space<smem>>
    %31 = vector.broadcast %30 : f32 to vector<128x128xf32>
    %32 = arith.mulf %31, %5 : vector<128x128xf32>
    %33 = math.exp2 %32 : vector<128x128xf32>
    %34 = vector.broadcast %29 : f32 to vector<128x128xf32>
    %35 = arith.mulf %34, %33 : vector<128x128xf32>
    %36 = arith.addf %28, %35 : vector<128x128xf32>
    %c4 = arith.constant 4 : index
    %37 = memref.load %arg6[%c4] : memref<8xf32, #tpu.memory_space<smem>>
    %c4_9 = arith.constant 4 : index
    %38 = memref.load %arg5[%c4_9] : memref<8xf32, #tpu.memory_space<smem>>
    %39 = vector.broadcast %38 : f32 to vector<128x128xf32>
    %40 = arith.mulf %39, %5 : vector<128x128xf32>
    %41 = math.exp2 %40 : vector<128x128xf32>
    %42 = vector.broadcast %37 : f32 to vector<128x128xf32>
    %43 = arith.mulf %42, %41 : vector<128x128xf32>
    %44 = arith.addf %36, %43 : vector<128x128xf32>
    %c5 = arith.constant 5 : index
    %45 = memref.load %arg6[%c5] : memref<8xf32, #tpu.memory_space<smem>>
    %c5_10 = arith.constant 5 : index
    %46 = memref.load %arg5[%c5_10] : memref<8xf32, #tpu.memory_space<smem>>
    %47 = vector.broadcast %46 : f32 to vector<128x128xf32>
    %48 = arith.mulf %47, %5 : vector<128x128xf32>
    %49 = math.exp2 %48 : vector<128x128xf32>
    %50 = vector.broadcast %45 : f32 to vector<128x128xf32>
    %51 = arith.mulf %50, %49 : vector<128x128xf32>
    %52 = arith.addf %44, %51 : vector<128x128xf32>
    %c6 = arith.constant 6 : index
    %53 = memref.load %arg6[%c6] : memref<8xf32, #tpu.memory_space<smem>>
    %c6_11 = arith.constant 6 : index
    %54 = memref.load %arg5[%c6_11] : memref<8xf32, #tpu.memory_space<smem>>
    %55 = vector.broadcast %54 : f32 to vector<128x128xf32>
    %56 = arith.mulf %55, %5 : vector<128x128xf32>
    %57 = math.exp2 %56 : vector<128x128xf32>
    %58 = vector.broadcast %53 : f32 to vector<128x128xf32>
    %59 = arith.mulf %58, %57 : vector<128x128xf32>
    %60 = arith.addf %52, %59 : vector<128x128xf32>
    %c7 = arith.constant 7 : index
    %61 = memref.load %arg6[%c7] : memref<8xf32, #tpu.memory_space<smem>>
    %c7_12 = arith.constant 7 : index
    %62 = memref.load %arg5[%c7_12] : memref<8xf32, #tpu.memory_space<smem>>
    %63 = vector.broadcast %62 : f32 to vector<128x128xf32>
    %64 = arith.mulf %63, %5 : vector<128x128xf32>
    %65 = math.exp2 %64 : vector<128x128xf32>
    %66 = vector.broadcast %61 : f32 to vector<128x128xf32>
    %67 = arith.mulf %66, %65 : vector<128x128xf32>
    %68 = arith.addf %60, %67 : vector<128x128xf32>
    %c0_13 = arith.constant 0 : index
    %c0_14 = arith.constant 0 : index
    %69 = vector.load %arg8[%c0_13, %c0_14] : memref<1x128xf32, #tpu.memory_space<vmem>>, vector<1x128xf32>
    %c0_15 = arith.constant 0 : index
    %c0_16 = arith.constant 0 : index
    %70 = vector.load %arg4[%c0_15, %c0_16] : memref<128x1xf32, #tpu.memory_space<vmem>>, vector<128x1xf32>
    %71 = vector.broadcast %70 : vector<128x1xf32> to vector<128x128xf32>
    %72 = arith.mulf %68, %71 : vector<128x128xf32>
    %cst_17 = arith.constant dense<0.000000e+00> : vector<128xf32>
    %73 = vector.multi_reduction <add>, %72, %cst_17 [0] : vector<128x128xf32> to vector<128xf32>
    %74 = vector.shape_cast %73 : vector<128xf32> to vector<1x128xf32>
    %75 = arith.addf %69, %74 : vector<1x128xf32>
    %c0_18 = arith.constant 0 : index
    %c0_19 = arith.constant 0 : index
    %76 = vector.load %arg8[%c0_18, %c0_19] : memref<1x128xf32, #tpu.memory_space<vmem>>, vector<1x128xf32>
    tpu.vector_store %arg8[%c0_18, %c0_19], %75 {strides = array<i32>} : memref<1x128xf32, #tpu.memory_space<vmem>>, vector<1x128xf32>,
    %c0_i32_20 = arith.constant 0 : i32
    %77 = arith.cmpi eq, %arg1, %c0_i32_20 : i32
    %78 = arith.extui %77 : i1 to i32
    %c0_i32_21 = arith.constant 0 : i32
    %79 = arith.cmpi ne, %78, %c0_i32_21 : i32
    scf.if %79 {
      %c0_22 = arith.constant 0 : index
      %c0_23 = arith.constant 0 : index
      %80 = vector.load %arg8[%c0_22, %c0_23] : memref<1x128xf32, #tpu.memory_space<vmem>>, vector<1x128xf32>
      %c0_24 = arith.constant 0 : index
      %81 = memref.load %arg7[%c0_24] : memref<1xf32, #tpu.memory_space<smem>>
      %82 = vector.broadcast %81 : f32 to vector<1x128xf32>
      %83 = arith.addf %80, %82 : vector<1x128xf32>
      %cst_25 = arith.constant -1.000000e+00 : f32
      %cst_26 = arith.constant 1.000000e+00 : f32
      %84 = vector.broadcast %cst_25 : f32 to vector<1x128xf32>
      %85 = arith.maximumf %84, %83 : vector<1x128xf32>
      %86 = vector.broadcast %cst_26 : f32 to vector<1x128xf32>
      %87 = arith.minimumf %86, %85 : vector<1x128xf32>
      %c0_27 = arith.constant 0 : index
      %c0_28 = arith.constant 0 : index
      %88 = vector.load %arg8[%c0_27, %c0_28] : memref<1x128xf32, #tpu.memory_space<vmem>>, vector<1x128xf32>
      tpu.vector_store %arg8[%c0_27, %c0_28], %87 {strides = array<i32>} : memref<1x128xf32, #tpu.memory_space<vmem>>, vector<1x128xf32>,
    } else {
    }
    return
  }
  func.func @transform_0(%arg0: i32, %arg1: i32) -> (i32, i32) {
    %c0_i32 = arith.constant 0 : i32
    %c0_i32_0 = arith.constant 0 : i32
    return %arg1, %c0_i32 : i32, i32
  }
  func.func @transform_1(%arg0: i32, %arg1: i32) -> (i32, i32) {
    %c0_i32 = arith.constant 0 : i32
    %c0_i32_0 = arith.constant 0 : i32
    return %c0_i32, %arg0 : i32, i32
  }
  func.func @transform_2(%arg0: i32, %arg1: i32) -> (i32, i32) {
    %c0_i32 = arith.constant 0 : i32
    %c0_i32_0 = arith.constant 0 : i32
    return %arg1, %c0_i32 : i32, i32
  }
  func.func @transform_3(%arg0: i32, %arg1: i32) -> i32 {
    %c0_i32 = arith.constant 0 : i32
    %c0_i32_0 = arith.constant 0 : i32
    return %c0_i32 : i32
  }
  func.func @transform_4(%arg0: i32, %arg1: i32) -> i32 {
    %c0_i32 = arith.constant 0 : i32
    %c0_i32_0 = arith.constant 0 : i32
    return %c0_i32 : i32
  }
  func.func @transform_5(%arg0: i32, %arg1: i32) -> i32 {
    %c0_i32 = arith.constant 0 : i32
    %c0_i32_0 = arith.constant 0 : i32
    return %c0_i32 : i32
  }
  func.func @transform_6(%arg0: i32, %arg1: i32) -> (i32, i32) {
    %c0_i32 = arith.constant 0 : i32
    %c0_i32_0 = arith.constant 0 : i32
    return %c0_i32, %arg0 : i32, i32
  }
}

</mosaic_0001>

<llo_original>
// kernel: _easymkl_pallas.1
$region0: #{_easymkl_pallas.1}
  #allocation0 [shape = 'u32[]', space=smem, size = 0x4, offset = 0x4, fixed_abs, tag = 'smem constant byte address 0x4 - core index']
  #allocation1 [shape = 'u32[72,128]{1,0:T(1,128)}', space=vmem, size = 0x9000, scoped, tag = 'internal scratch']
  #allocation2 [shape = 'f32[1]{0:T(128)S(6)}', space=smem, size = 0x200, scoped, tag = 'scoped memory for _easymkl_pallas.1']
  %s0 = inlined_call_operand.vmem [shape: f32[128,40], index: 0, kind: input, shape index: {}]
  %s1 = inlined_call_operand.vmem [shape: f32[40,128], index: 1, kind: input, shape index: {}]
  %s2 = inlined_call_operand.vmem [shape: f32[128,1], index: 2, kind: input, shape index: {}]
  %s3 = inlined_call_operand.vmem [shape: f32[8], index: 3, kind: input, shape index: {}]
  %s4 = inlined_call_operand.vmem [shape: f32[8], index: 4, kind: input, shape index: {}]
  %s5 = inlined_call_operand.<no memory space> [shape: f32[1], index: 5, kind: input, shape index: {}]
  %s6 = inlined_call_operand.vmem [shape: f32[1,128], index: 6, kind: output, shape index: {}]
  %s7 = sld [smem:[#allocation0]]
  $region50: #{_easymkl_pallas.1} parent=0
    _
  %s9 = ssub.s32 1, %s7
  %s10 = scalar_select 0, %s9, %s7
  %11 = sst [smem:[#allocation2]] %s5
  $region1: #{_easymkl_pallas.1} parent=0
    #allocation3 [shape = 'u8[512]{0}', space=smem, size = 0x200, scoped, tag = 'input window, operand 3, single buffered']
    #allocation4 [shape = 's32[1]{0}', space=sflag, size = 0x4, scoped, tag = 'scoped memory for _easymkl_pallas.1']
    #allocation5 [shape = 'u8[512]{0}', space=smem, size = 0x200, scoped, tag = 'input window, operand 4, single buffered']
    #allocation6 [shape = 's32[1]{0}', space=sflag, size = 0x4, scoped, tag = 'scoped memory for _easymkl_pallas.1']
    %12 = vsyncpa [#allocation4], 0
    %13 = vsyncpa [#allocation6], 0
    // Predicated region
    $region2: #{_easymkl_pallas.1} parent=1 // pred_check
      _
    $region3: #{_easymkl_pallas.1} parent=1 // pred_check_branch
      %15 = sbr.rel (0) target = $region5
    $region4: #{_easymkl_pallas.1} parent=1 // pred_region
      _
    $region5: #{_easymkl_pallas.1} parent=1 // pred_fallthru
      _
    // Predicated region
    $region6: #{_easymkl_pallas.1} parent=1 // pred_check
      _
    $region7: #{_easymkl_pallas.1} parent=1 // pred_check_branch
      %17 = sbr.rel (0) target = $region9
    $region8: #{_easymkl_pallas.1} parent=1 // pred_region
      _
    $region9: #{_easymkl_pallas.1} parent=1 // pred_fallthru
      _
    // Predicated region
    $region10: #{_easymkl_pallas.1} parent=1 // pred_check
      _
    $region11: #{_easymkl_pallas.1} parent=1 // pred_check_branch
      %19 = sbr.rel (0) target = $region13
    $region12: #{_easymkl_pallas.1} parent=1 // pred_region
      _
    $region13: #{_easymkl_pallas.1} parent=1 // pred_fallthru
      _
    // Predicated region
    $region14: #{_easymkl_pallas.1} parent=1 // pred_check
      _
    $region15: #{_easymkl_pallas.1} parent=1 // pred_check_branch
      %21 = sbr.rel (0) target = $region17
    $region16: #{_easymkl_pallas.1} parent=1 // pred_region
      %23 = vsyncadd [#allocation4], 0
      %s25 = sshll.u32 %s3, 4
      %s26 = int_to_ptr.vmem [resolvable:$true] %s25
      %28 = dma.vmem_to_smem %s26, 16, [#allocation3], [#allocation4]
    $region17: #{_easymkl_pallas.1} parent=1 // pred_fallthru
      _
    // Predicated region
    $region18: #{_easymkl_pallas.1} parent=1 // pred_check
      _
    $region19: #{_easymkl_pallas.1} parent=1 // pred_check_branch
      %30 = sbr.rel (0) target = $region21
    $region20: #{_easymkl_pallas.1} parent=1 // pred_region
      %32 = vsyncadd [#allocation6], 0
      %s34 = sshll.u32 %s4, 4
      %s35 = int_to_ptr.vmem [resolvable:$true] %s34
      %37 = dma.vmem_to_smem %s35, 16, [#allocation5], [#allocation6]
    $region21: #{_easymkl_pallas.1} parent=1 // pred_fallthru
      _
    // Predicated region
    $region22: #{_easymkl_pallas.1} parent=1 // pred_check
      _
    $region23: #{_easymkl_pallas.1} parent=1 // pred_check_branch
      %39 = sbr.rel (0) target = $region25
    $region24: #{_easymkl_pallas.1} parent=1 // pred_region
      _
    $region25: #{_easymkl_pallas.1} parent=1 // pred_fallthru
      _
    // Predicated region
    $region26: #{_easymkl_pallas.1} parent=1 // pred_check
      _
    $region27: #{_easymkl_pallas.1} parent=1 // pred_check_branch
      %41 = sbr.rel (0) target = $region29
    $region28: #{_easymkl_pallas.1} parent=1 // pred_region
      %43 = dma.done [#allocation4], 16
    $region29: #{_easymkl_pallas.1} parent=1 // pred_fallthru
      _
    // Predicated region
    $region30: #{_easymkl_pallas.1} parent=1 // pred_check
      _
    $region31: #{_easymkl_pallas.1} parent=1 // pred_check_branch
      %45 = sbr.rel (0) target = $region33
    $region32: #{_easymkl_pallas.1} parent=1 // pred_region
      %47 = dma.done [#allocation6], 16
    $region33: #{_easymkl_pallas.1} parent=1 // pred_fallthru
      _
    %48 = sfence
    %p49 = scmp.eq.s32.totalorder 0, 0
    // Predicated region
    $region34: #{_easymkl_pallas.1} parent=1 // pred_check
      %p50 = pneg %p49
    $region35: #{_easymkl_pallas.1} parent=1 // pred_check_branch
      %52 = sbr.rel (%p50) target = $region37
    $region36: #{_easymkl_pallas.1} parent=1 // pred_region
      %53 = vst [vmem:[%s6] sm:$0x1] 0.0
    $region37: #{_easymkl_pallas.1} parent=1 // pred_fallthru
      _
    %v54 = vld [vmem:[%s0] sm:$0xff]
    %v55 = vld [vmem:[%s0 + $0x8] sm:$0xff]
    %v56 = vld [vmem:[%s0 + $0x10] sm:$0xff]
    %v57 = vld [vmem:[%s0 + $0x18] sm:$0xff]
    %v58 = vld [vmem:[%s0 + $0x20] sm:$0xff]
    %v59 = vld [vmem:[%s0 + $0x28] sm:$0xff]
    %v60 = vld [vmem:[%s0 + $0x30] sm:$0xff]
    %v61 = vld [vmem:[%s0 + $0x38] sm:$0xff]
    %v62 = vld [vmem:[%s0 + $0x40] sm:$0xff]
    %v63 = vld [vmem:[%s0 + $0x48] sm:$0xff]
    %v64 = vld [vmem:[%s0 + $0x50] sm:$0xff]
    %v65 = vld [vmem:[%s0 + $0x58] sm:$0xff]
    %v66 = vld [vmem:[%s0 + $0x60] sm:$0xff]
    %v67 = vld [vmem:[%s0 + $0x68] sm:$0xff]
    %v68 = vld [vmem:[%s0 + $0x70] sm:$0xff]
    %v69 = vld [vmem:[%s0 + $0x78] sm:$0xff]
    %v70 = vld [vmem:[%s1] sm:$0xff]
    %v71 = vld [vmem:[%s1 + $0x8] sm:$0xff]
    %v72 = vld [vmem:[%s1 + $0x10] sm:$0xff]
    %v73 = vld [vmem:[%s1 + $0x18] sm:$0xff]
    %v74 = vld [vmem:[%s1 + $0x20] sm:$0xff]
    %vm75 = vcmask 326656
    %v77 = vsel %vm75, %v54, 0
    %v80 = vsel %vm75, %v55, 0
    %v83 = vsel %vm75, %v56, 0
    %v86 = vsel %vm75, %v57, 0
    %v89 = vsel %vm75, %v58, 0
    %v92 = vsel %vm75, %v59, 0
    %v95 = vsel %vm75, %v60, 0
    %v98 = vsel %vm75, %v61, 0
    %v101 = vsel %vm75, %v62, 0
    %v104 = vsel %vm75, %v63, 0
    %v107 = vsel %vm75, %v64, 0
    %v110 = vsel %vm75, %v65, 0
    %v113 = vsel %vm75, %v66, 0
    %v116 = vsel %vm75, %v67, 0
    %v119 = vsel %vm75, %v68, 0
    %v122 = vsel %vm75, %v69, 0
    %124 = vmatpush.msra.mxu0 0.0
    %125 = vmatpush.msra.mxu0 0.0
    %126 = vmatpush.msra.mxu0 0.0
    %127 = vmatpush.msra.mxu0 0.0
    %128 = vmatpush.msra.mxu0 0.0
    %129 = vmatpush.msra.mxu0 0.0
    %130 = vmatpush.msra.mxu0 0.0
    %131 = vmatpush.msra.mxu0 0.0
    %132 = vmatpush.msra.mxu0 0.0
    %133 = vmatpush.msra.mxu0 0.0
    %134 = vmatpush.msra.mxu0 0.0
    %135 = vmatpush.msra.mxu0 %v74
    %136 = vmatpush.msra.mxu0 %v73
    %137 = vmatpush.msra.mxu0 %v72
    %138 = vmatpush.msra.mxu0 %v71
    %139 = vmatpush.msra.mxu0 %v70
    %140 = vmatmul.f32.gmra.mxu0 %v77
    %v141 = vpop.f32.mrf.mxu0
    %v142 = vadd.f32 0.0, %v141
    %143 = vmatmul.f32.gmra.mxu0 %v80
    %v144 = vpop.f32.mrf.mxu0
    %v145 = vadd.f32 0.0, %v144
    %146 = vmatmul.f32.gmra.mxu0 %v83
    %v147 = vpop.f32.mrf.mxu0
    %v148 = vadd.f32 0.0, %v147
    %149 = vmatmul.f32.gmra.mxu0 %v86
    %v150 = vpop.f32.mrf.mxu0
    %v151 = vadd.f32 0.0, %v150
    %152 = vmatmul.f32.gmra.mxu0 %v89
    %v153 = vpop.f32.mrf.mxu0
    %v154 = vadd.f32 0.0, %v153
    %155 = vmatmul.f32.gmra.mxu0 %v92
    %v156 = vpop.f32.mrf.mxu0
    %v157 = vadd.f32 0.0, %v156
    %158 = vmatmul.f32.gmra.mxu0 %v95
    %v159 = vpop.f32.mrf.mxu0
    %v160 = vadd.f32 0.0, %v159
    %161 = vmatmul.f32.gmra.mxu0 %v98
    %v162 = vpop.f32.mrf.mxu0
    %v163 = vadd.f32 0.0, %v162
    %164 = vmatmul.f32.gmra.mxu0 %v101
    %v165 = vpop.f32.mrf.mxu0
    %v166 = vadd.f32 0.0, %v165
    %167 = vmatmul.f32.gmra.mxu0 %v104
    %v168 = vpop.f32.mrf.mxu0
    %v169 = vadd.f32 0.0, %v168
    %170 = vmatmul.f32.gmra.mxu0 %v107
    %v171 = vpop.f32.mrf.mxu0
    %v172 = vadd.f32 0.0, %v171
    %173 = vmatmul.f32.gmra.mxu0 %v110
    %v174 = vpop.f32.mrf.mxu0
    %v175 = vadd.f32 0.0, %v174
    %176 = vmatmul.f32.gmra.mxu0 %v113
    %v177 = vpop.f32.mrf.mxu0
    %v178 = vadd.f32 0.0, %v177
    %179 = vmatmul.f32.gmra.mxu0 %v116
    %v180 = vpop.f32.mrf.mxu0
    %v181 = vadd.f32 0.0, %v180
    %182 = vmatmul.f32.gmra.mxu0 %v119
    %v183 = vpop.f32.mrf.mxu0
    %v184 = vadd.f32 0.0, %v183
    %185 = vmatmul.f32.gmra.mxu0 %v122
    %v186 = vpop.f32.mrf.mxu0
    %v187 = vadd.f32 0.0, %v186
    %188 = vdwg.mxu0
    %s189 = sld [smem:[#allocation5]]
    %s190 = sld [smem:[#allocation3]]
    %v191 = vstv %s190
    %v192 = vmul.f32 %v191, %v142
    %v193 = vmul.f32 %v191, %v145
    %v194 = vmul.f32 %v191, %v148
    %v195 = vmul.f32 %v191, %v151
    %v196 = vmul.f32 %v191, %v154
    %v197 = vmul.f32 %v191, %v157
    %v198 = vmul.f32 %v191, %v160
    %v199 = vmul.f32 %v191, %v163
    %v200 = vmul.f32 %v191, %v166
    %v201 = vmul.f32 %v191, %v169
    %v202 = vmul.f32 %v191, %v172
    %v203 = vmul.f32 %v191, %v175
    %v204 = vmul.f32 %v191, %v178
    %v205 = vmul.f32 %v191, %v181
    %v206 = vmul.f32 %v191, %v184
    %v207 = vmul.f32 %v191, %v187
    %v208 = vpow.pop %v192
    %v209 = vpow.pop %v193
    %v210 = vpow.pop %v194
    %v211 = vpow.pop %v195
    %v212 = vpow.pop %v196
    %v213 = vpow.pop %v197
    %v214 = vpow.pop %v198
    %v215 = vpow.pop %v199
    %v216 = vpow.pop %v200
    %v217 = vpow.pop %v201
    %v218 = vpow.pop %v202
    %v219 = vpow.pop %v203
    %v220 = vpow.pop %v204
    %v221 = vpow.pop %v205
    %v222 = vpow.pop %v206
    %v223 = vpow.pop %v207
    %v224 = vstv %s189
    %v225 = vmul.f32 %v224, %v208
    %v226 = vmul.f32 %v224, %v209
    %v227 = vmul.f32 %v224, %v210
    %v228 = vmul.f32 %v224, %v211
    %v229 = vmul.f32 %v224, %v212
    %v230 = vmul.f32 %v224, %v213
    %v231 = vmul.f32 %v224, %v214
    %v232 = vmul.f32 %v224, %v215
    %v233 = vmul.f32 %v224, %v216
    %v234 = vmul.f32 %v224, %v217
    %v235 = vmul.f32 %v224, %v218
    %v236 = vmul.f32 %v224, %v219
    %v237 = vmul.f32 %v224, %v220
    %v238 = vmul.f32 %v224, %v221
    %v239 = vmul.f32 %v224, %v222
    %v240 = vmul.f32 %v224, %v223
    %s241 = sld [smem:[#allocation5 + $0x1]]
    %s242 = sld [smem:[#allocation3 + $0x1]]
    %v243 = vstv %s242
    %v244 = vmul.f32 %v243, %v142
    %v245 = vmul.f32 %v243, %v145
    %v246 = vmul.f32 %v243, %v148
    %v247 = vmul.f32 %v243, %v151
    %v248 = vmul.f32 %v243, %v154
    %v249 = vmul.f32 %v243, %v157
    %v250 = vmul.f32 %v243, %v160
    %v251 = vmul.f32 %v243, %v163
    %v252 = vmul.f32 %v243, %v166
    %v253 = vmul.f32 %v243, %v169
    %v254 = vmul.f32 %v243, %v172
    %v255 = vmul.f32 %v243, %v175
    %v256 = vmul.f32 %v243, %v178
    %v257 = vmul.f32 %v243, %v181
    %v258 = vmul.f32 %v243, %v184
    %v259 = vmul.f32 %v243, %v187
    %v260 = vpow.pop %v244
    %v261 = vpow.pop %v245
    %v262 = vpow.pop %v246
    %v263 = vpow.pop %v247
    %v264 = vpow.pop %v248
    %v265 = vpow.pop %v249
    %v266 = vpow.pop %v250
    %v267 = vpow.pop %v251
    %v268 = vpow.pop %v252
    %v269 = vpow.pop %v253
    %v270 = vpow.pop %v254
    %v271 = vpow.pop %v255
    %v272 = vpow.pop %v256
    %v273 = vpow.pop %v257
    %v274 = vpow.pop %v258
    %v275 = vpow.pop %v259
    %v276 = vstv %s241
    %v277 = vmul.f32 %v276, %v260
    %v278 = vmul.f32 %v276, %v261
    %v279 = vmul.f32 %v276, %v262
    %v280 = vmul.f32 %v276, %v263
    %v281 = vmul.f32 %v276, %v264
    %v282 = vmul.f32 %v276, %v265
    %v283 = vmul.f32 %v276, %v266
    %v284 = vmul.f32 %v276, %v267
    %v285 = vmul.f32 %v276, %v268
    %v286 = vmul.f32 %v276, %v269
    %v287 = vmul.f32 %v276, %v270
    %v288 = vmul.f32 %v276, %v271
    %v289 = vmul.f32 %v276, %v272
    %v290 = vmul.f32 %v276, %v273
    %v291 = vmul.f32 %v276, %v274
    %v292 = vmul.f32 %v276, %v275
    %v293 = vadd.f32 %v225, %v277
    %v294 = vadd.f32 %v226, %v278
    %v295 = vadd.f32 %v227, %v279
    %v296 = vadd.f32 %v228, %v280
    %v297 = vadd.f32 %v229, %v281
    %v298 = vadd.f32 %v230, %v282
    %v299 = vadd.f32 %v231, %v283
    %v300 = vadd.f32 %v232, %v284
    %v301 = vadd.f32 %v233, %v285
    %v302 = vadd.f32 %v234, %v286
    %v303 = vadd.f32 %v235, %v287
    %v304 = vadd.f32 %v236, %v288
    %v305 = vadd.f32 %v237, %v289
    %v306 = vadd.f32 %v238, %v290
    %v307 = vadd.f32 %v239, %v291
    %v308 = vadd.f32 %v240, %v292
    %s309 = sld [smem:[#allocation5 + $0x2]]
    %s310 = sld [smem:[#allocation3 + $0x2]]
    %v311 = vstv %s310
    %v312 = vmul.f32 %v311, %v142
    %v313 = vmul.f32 %v311, %v145
    %v314 = vmul.f32 %v311, %v148
    %v315 = vmul.f32 %v311, %v151
    %v316 = vmul.f32 %v311, %v154
    %v317 = vmul.f32 %v311, %v157
    %v318 = vmul.f32 %v311, %v160
    %v319 = vmul.f32 %v311, %v163
    %v320 = vmul.f32 %v311, %v166
    %v321 = vmul.f32 %v311, %v169
    %v322 = vmul.f32 %v311, %v172
    %v323 = vmul.f32 %v311, %v175
    %v324 = vmul.f32 %v311, %v178
    %v325 = vmul.f32 %v311, %v181
    %v326 = vmul.f32 %v311, %v184
    %v327 = vmul.f32 %v311, %v187
    %v328 = vpow.pop %v312
    %v329 = vpow.pop %v313
    %v330 = vpow.pop %v314
    %v331 = vpow.pop %v315
    %v332 = vpow.pop %v316
    %v333 = vpow.pop %v317
    %v334 = vpow.pop %v318
    %v335 = vpow.pop %v319
    %v336 = vpow.pop %v320
    %v337 = vpow.pop %v321
    %v338 = vpow.pop %v322
    %v339 = vpow.pop %v323
    %v340 = vpow.pop %v324
    %v341 = vpow.pop %v325
    %v342 = vpow.pop %v326
    %v343 = vpow.pop %v327
    %v344 = vstv %s309
    %v345 = vmul.f32 %v344, %v328
    %v346 = vmul.f32 %v344, %v329
    %v347 = vmul.f32 %v344, %v330
    %v348 = vmul.f32 %v344, %v331
    %v349 = vmul.f32 %v344, %v332
    %v350 = vmul.f32 %v344, %v333
    %v351 = vmul.f32 %v344, %v334
    %v352 = vmul.f32 %v344, %v335
    %v353 = vmul.f32 %v344, %v336
    %v354 = vmul.f32 %v344, %v337
    %v355 = vmul.f32 %v344, %v338
    %v356 = vmul.f32 %v344, %v339
    %v357 = vmul.f32 %v344, %v340
    %v358 = vmul.f32 %v344, %v341
    %v359 = vmul.f32 %v344, %v342
    %v360 = vmul.f32 %v344, %v343
    %v361 = vadd.f32 %v293, %v345
    %v362 = vadd.f32 %v294, %v346
    %v363 = vadd.f32 %v295, %v347
    %v364 = vadd.f32 %v296, %v348
    %v365 = vadd.f32 %v297, %v349
    %v366 = vadd.f32 %v298, %v350
    %v367 = vadd.f32 %v299, %v351
    %v368 = vadd.f32 %v300, %v352
    %v369 = vadd.f32 %v301, %v353
    %v370 = vadd.f32 %v302, %v354
    %v371 = vadd.f32 %v303, %v355
    %v372 = vadd.f32 %v304, %v356
    %v373 = vadd.f32 %v305, %v357
    %v374 = vadd.f32 %v306, %v358
    %v375 = vadd.f32 %v307, %v359
    %v376 = vadd.f32 %v308, %v360
    %s377 = sld [smem:[#allocation5 + $0x3]]
    %s378 = sld [smem:[#allocation3 + $0x3]]
    %v379 = vstv %s378
    %v380 = vmul.f32 %v379, %v142
    %v381 = vmul.f32 %v379, %v145
    %v382 = vmul.f32 %v379, %v148
    %v383 = vmul.f32 %v379, %v151
    %v384 = vmul.f32 %v379, %v154
    %v385 = vmul.f32 %v379, %v157
    %v386 = vmul.f32 %v379, %v160
    %v387 = vmul.f32 %v379, %v163
    %v388 = vmul.f32 %v379, %v166
    %v389 = vmul.f32 %v379, %v169
    %v390 = vmul.f32 %v379, %v172
    %v391 = vmul.f32 %v379, %v175
    %v392 = vmul.f32 %v379, %v178
    %v393 = vmul.f32 %v379, %v181
    %v394 = vmul.f32 %v379, %v184
    %v395 = vmul.f32 %v379, %v187
    %v396 = vpow.pop %v380
    %v397 = vpow.pop %v381
    %v398 = vpow.pop %v382
    %v399 = vpow.pop %v383
    %v400 = vpow.pop %v384
    %v401 = vpow.pop %v385
    %v402 = vpow.pop %v386
    %v403 = vpow.pop %v387
    %v404 = vpow.pop %v388
    %v405 = vpow.pop %v389
    %v406 = vpow.pop %v390
    %v407 = vpow.pop %v391
    %v408 = vpow.pop %v392
    %v409 = vpow.pop %v393
    %v410 = vpow.pop %v394
    %v411 = vpow.pop %v395
    %v412 = vstv %s377
    %v413 = vmul.f32 %v412, %v396
    %v414 = vmul.f32 %v412, %v397
    %v415 = vmul.f32 %v412, %v398
    %v416 = vmul.f32 %v412, %v399
    %v417 = vmul.f32 %v412, %v400
    %v418 = vmul.f32 %v412, %v401
    %v419 = vmul.f32 %v412, %v402
    %v420 = vmul.f32 %v412, %v403
    %v421 = vmul.f32 %v412, %v404
    %v422 = vmul.f32 %v412, %v405
    %v423 = vmul.f32 %v412, %v406
    %v424 = vmul.f32 %v412, %v407
    %v425 = vmul.f32 %v412, %v408
    %v426 = vmul.f32 %v412, %v409
    %v427 = vmul.f32 %v412, %v410
    %v428 = vmul.f32 %v412, %v411
    %v429 = vadd.f32 %v361, %v413
    %v430 = vadd.f32 %v362, %v414
    %v431 = vadd.f32 %v363, %v415
    %v432 = vadd.f32 %v364, %v416
    %v433 = vadd.f32 %v365, %v417
    %v434 = vadd.f32 %v366, %v418
    %v435 = vadd.f32 %v367, %v419
    %v436 = vadd.f32 %v368, %v420
    %v437 = vadd.f32 %v369, %v421
    %v438 = vadd.f32 %v370, %v422
    %v439 = vadd.f32 %v371, %v423
    %v440 = vadd.f32 %v372, %v424
    %v441 = vadd.f32 %v373, %v425
    %v442 = vadd.f32 %v374, %v426
    %v443 = vadd.f32 %v375, %v427
    %v444 = vadd.f32 %v376, %v428
    %s445 = sld [smem:[#allocation5 + $0x4]]
    %s446 = sld [smem:[#allocation3 + $0x4]]
    %v447 = vstv %s446
    %v448 = vmul.f32 %v447, %v142
    %v449 = vmul.f32 %v447, %v145
    %v450 = vmul.f32 %v447, %v148
    %v451 = vmul.f32 %v447, %v151
    %v452 = vmul.f32 %v447, %v154
    %v453 = vmul.f32 %v447, %v157
    %v454 = vmul.f32 %v447, %v160
    %v455 = vmul.f32 %v447, %v163
    %v456 = vmul.f32 %v447, %v166
    %v457 = vmul.f32 %v447, %v169
    %v458 = vmul.f32 %v447, %v172
    %v459 = vmul.f32 %v447, %v175
    %v460 = vmul.f32 %v447, %v178
    %v461 = vmul.f32 %v447, %v181
    %v462 = vmul.f32 %v447, %v184
    %v463 = vmul.f32 %v447, %v187
    %v464 = vpow.pop %v448
    %v465 = vpow.pop %v449
    %v466 = vpow.pop %v450
    %v467 = vpow.pop %v451
    %v468 = vpow.pop %v452
    %v469 = vpow.pop %v453
    %v470 = vpow.pop %v454
    %v471 = vpow.pop %v455
    %v472 = vpow.pop %v456
    %v473 = vpow.pop %v457
    %v474 = vpow.pop %v458
    %v475 = vpow.pop %v459
    %v476 = vpow.pop %v460
    %v477 = vpow.pop %v461
    %v478 = vpow.pop %v462
    %v479 = vpow.pop %v463
    %v480 = vstv %s445
    %v481 = vmul.f32 %v480, %v464
    %v482 = vmul.f32 %v480, %v465
    %v483 = vmul.f32 %v480, %v466
    %v484 = vmul.f32 %v480, %v467
    %v485 = vmul.f32 %v480, %v468
    %v486 = vmul.f32 %v480, %v469
    %v487 = vmul.f32 %v480, %v470
    %v488 = vmul.f32 %v480, %v471
    %v489 = vmul.f32 %v480, %v472
    %v490 = vmul.f32 %v480, %v473
    %v491 = vmul.f32 %v480, %v474
    %v492 = vmul.f32 %v480, %v475
    %v493 = vmul.f32 %v480, %v476
    %v494 = vmul.f32 %v480, %v477
    %v495 = vmul.f32 %v480, %v478
    %v496 = vmul.f32 %v480, %v479
    %v497 = vadd.f32 %v429, %v481
    %v498 = vadd.f32 %v430, %v482
    %v499 = vadd.f32 %v431, %v483
    %v500 = vadd.f32 %v432, %v484
    %v501 = vadd.f32 %v433, %v485
    %v502 = vadd.f32 %v434, %v486
    %v503 = vadd.f32 %v435, %v487
    %v504 = vadd.f32 %v436, %v488
    %v505 = vadd.f32 %v437, %v489
    %v506 = vadd.f32 %v438, %v490
    %v507 = vadd.f32 %v439, %v491
    %v508 = vadd.f32 %v440, %v492
    %v509 = vadd.f32 %v441, %v493
    %v510 = vadd.f32 %v442, %v494
    %v511 = vadd.f32 %v443, %v495
    %v512 = vadd.f32 %v444, %v496
    %s513 = sld [smem:[#allocation5 + $0x5]]
    %s514 = sld [smem:[#allocation3 + $0x5]]
    %v515 = vstv %s514
    %v516 = vmul.f32 %v515, %v142
    %v517 = vmul.f32 %v515, %v145
    %v518 = vmul.f32 %v515, %v148
    %v519 = vmul.f32 %v515, %v151
    %v520 = vmul.f32 %v515, %v154
    %v521 = vmul.f32 %v515, %v157
    %v522 = vmul.f32 %v515, %v160
    %v523 = vmul.f32 %v515, %v163
    %v524 = vmul.f32 %v515, %v166
    %v525 = vmul.f32 %v515, %v169
    %v526 = vmul.f32 %v515, %v172
    %v527 = vmul.f32 %v515, %v175
    %v528 = vmul.f32 %v515, %v178
    %v529 = vmul.f32 %v515, %v181
    %v530 = vmul.f32 %v515, %v184
    %v531 = vmul.f32 %v515, %v187
    %v532 = vpow.pop %v516
    %v533 = vpow.pop %v517
    %v534 = vpow.pop %v518
    %v535 = vpow.pop %v519
    %v536 = vpow.pop %v520
    %v537 = vpow.pop %v521
    %v538 = vpow.pop %v522
    %v539 = vpow.pop %v523
    %v540 = vpow.pop %v524
    %v541 = vpow.pop %v525
    %v542 = vpow.pop %v526
    %v543 = vpow.pop %v527
    %v544 = vpow.pop %v528
    %v545 = vpow.pop %v529
    %v546 = vpow.pop %v530
    %v547 = vpow.pop %v531
    %v548 = vstv %s513
    %v549 = vmul.f32 %v548, %v532
    %v550 = vmul.f32 %v548, %v533
    %v551 = vmul.f32 %v548, %v534
    %v552 = vmul.f32 %v548, %v535
    %v553 = vmul.f32 %v548, %v536
    %v554 = vmul.f32 %v548, %v537
    %v555 = vmul.f32 %v548, %v538
    %v556 = vmul.f32 %v548, %v539
    %v557 = vmul.f32 %v548, %v540
    %v558 = vmul.f32 %v548, %v541
    %v559 = vmul.f32 %v548, %v542
    %v560 = vmul.f32 %v548, %v543
    %v561 = vmul.f32 %v548, %v544
    %v562 = vmul.f32 %v548, %v545
    %v563 = vmul.f32 %v548, %v546
    %v564 = vmul.f32 %v548, %v547
    %v565 = vadd.f32 %v497, %v549
    %v566 = vadd.f32 %v498, %v550
    %v567 = vadd.f32 %v499, %v551
    %v568 = vadd.f32 %v500, %v552
    %v569 = vadd.f32 %v501, %v553
    %v570 = vadd.f32 %v502, %v554
    %v571 = vadd.f32 %v503, %v555
    %v572 = vadd.f32 %v504, %v556
    %v573 = vadd.f32 %v505, %v557
    %v574 = vadd.f32 %v506, %v558
    %v575 = vadd.f32 %v507, %v559
    %v576 = vadd.f32 %v508, %v560
    %v577 = vadd.f32 %v509, %v561
    %v578 = vadd.f32 %v510, %v562
    %v579 = vadd.f32 %v511, %v563
    %v580 = vadd.f32 %v512, %v564
    %s581 = sld [smem:[#allocation5 + $0x6]]
    %s582 = sld [smem:[#allocation3 + $0x6]]
    %v583 = vstv %s582
    %v584 = vmul.f32 %v583, %v142
    %v585 = vmul.f32 %v583, %v145
    %v586 = vmul.f32 %v583, %v148
    %v587 = vmul.f32 %v583, %v151
    %v588 = vmul.f32 %v583, %v154
    %v589 = vmul.f32 %v583, %v157
    %v590 = vmul.f32 %v583, %v160
    %v591 = vmul.f32 %v583, %v163
    %v592 = vmul.f32 %v583, %v166
    %v593 = vmul.f32 %v583, %v169
    %v594 = vmul.f32 %v583, %v172
    %v595 = vmul.f32 %v583, %v175
    %v596 = vmul.f32 %v583, %v178
    %v597 = vmul.f32 %v583, %v181
    %v598 = vmul.f32 %v583, %v184
    %v599 = vmul.f32 %v583, %v187
    %v600 = vpow.pop %v584
    %v601 = vpow.pop %v585
    %v602 = vpow.pop %v586
    %v603 = vpow.pop %v587
    %v604 = vpow.pop %v588
    %v605 = vpow.pop %v589
    %v606 = vpow.pop %v590
    %v607 = vpow.pop %v591
    %v608 = vpow.pop %v592
    %v609 = vpow.pop %v593
    %v610 = vpow.pop %v594
    %v611 = vpow.pop %v595
    %v612 = vpow.pop %v596
    %v613 = vpow.pop %v597
    %v614 = vpow.pop %v598
    %v615 = vpow.pop %v599
    %v616 = vstv %s581
    %v617 = vmul.f32 %v616, %v600
    %v618 = vmul.f32 %v616, %v601
    %v619 = vmul.f32 %v616, %v602
    %v620 = vmul.f32 %v616, %v603
    %v621 = vmul.f32 %v616, %v604
    %v622 = vmul.f32 %v616, %v605
    %v623 = vmul.f32 %v616, %v606
    %v624 = vmul.f32 %v616, %v607
    %v625 = vmul.f32 %v616, %v608
    %v626 = vmul.f32 %v616, %v609
    %v627 = vmul.f32 %v616, %v610
    %v628 = vmul.f32 %v616, %v611
    %v629 = vmul.f32 %v616, %v612
    %v630 = vmul.f32 %v616, %v613
    %v631 = vmul.f32 %v616, %v614
    %v632 = vmul.f32 %v616, %v615
    %v633 = vadd.f32 %v565, %v617
    %v634 = vadd.f32 %v566, %v618
    %v635 = vadd.f32 %v567, %v619
    %v636 = vadd.f32 %v568, %v620
    %v637 = vadd.f32 %v569, %v621
    %v638 = vadd.f32 %v570, %v622
    %v639 = vadd.f32 %v571, %v623
    %v640 = vadd.f32 %v572, %v624
    %v641 = vadd.f32 %v573, %v625
    %v642 = vadd.f32 %v574, %v626
    %v643 = vadd.f32 %v575, %v627
    %v644 = vadd.f32 %v576, %v628
    %v645 = vadd.f32 %v577, %v629
    %v646 = vadd.f32 %v578, %v630
    %v647 = vadd.f32 %v579, %v631
    %v648 = vadd.f32 %v580, %v632
    %s649 = sld [smem:[#allocation5 + $0x7]]
    %s650 = sld [smem:[#allocation3 + $0x7]]
    %v651 = vstv %s650
    %v652 = vmul.f32 %v651, %v142
    %v653 = vmul.f32 %v651, %v145
    %v654 = vmul.f32 %v651, %v148
    %v655 = vmul.f32 %v651, %v151
    %v656 = vmul.f32 %v651, %v154
    %v657 = vmul.f32 %v651, %v157
    %v658 = vmul.f32 %v651, %v160
    %v659 = vmul.f32 %v651, %v163
    %v660 = vmul.f32 %v651, %v166
    %v661 = vmul.f32 %v651, %v169
    %v662 = vmul.f32 %v651, %v172
    %v663 = vmul.f32 %v651, %v175
    %v664 = vmul.f32 %v651, %v178
    %v665 = vmul.f32 %v651, %v181
    %v666 = vmul.f32 %v651, %v184
    %v667 = vmul.f32 %v651, %v187
    %v668 = vpow.pop %v652
    %v669 = vpow.pop %v653
    %v670 = vpow.pop %v654
    %v671 = vpow.pop %v655
    %v672 = vpow.pop %v656
    %v673 = vpow.pop %v657
    %v674 = vpow.pop %v658
    %v675 = vpow.pop %v659
    %v676 = vpow.pop %v660
    %v677 = vpow.pop %v661
    %v678 = vpow.pop %v662
    %v679 = vpow.pop %v663
    %v680 = vpow.pop %v664
    %v681 = vpow.pop %v665
    %v682 = vpow.pop %v666
    %v683 = vpow.pop %v667
    %v684 = vstv %s649
    %v685 = vmul.f32 %v684, %v668
    %v686 = vmul.f32 %v684, %v669
    %v687 = vmul.f32 %v684, %v670
    %v688 = vmul.f32 %v684, %v671
    %v689 = vmul.f32 %v684, %v672
    %v690 = vmul.f32 %v684, %v673
    %v691 = vmul.f32 %v684, %v674
    %v692 = vmul.f32 %v684, %v675
    %v693 = vmul.f32 %v684, %v676
    %v694 = vmul.f32 %v684, %v677
    %v695 = vmul.f32 %v684, %v678
    %v696 = vmul.f32 %v684, %v679
    %v697 = vmul.f32 %v684, %v680
    %v698 = vmul.f32 %v684, %v681
    %v699 = vmul.f32 %v684, %v682
    %v700 = vmul.f32 %v684, %v683
    %v701 = vadd.f32 %v633, %v685
    %v702 = vadd.f32 %v634, %v686
    %v703 = vadd.f32 %v635, %v687
    %v704 = vadd.f32 %v636, %v688
    %v705 = vadd.f32 %v637, %v689
    %v706 = vadd.f32 %v638, %v690
    %v707 = vadd.f32 %v639, %v691
    %v708 = vadd.f32 %v640, %v692
    %v709 = vadd.f32 %v641, %v693
    %v710 = vadd.f32 %v642, %v694
    %v711 = vadd.f32 %v643, %v695
    %v712 = vadd.f32 %v644, %v696
    %v713 = vadd.f32 %v645, %v697
    %v714 = vadd.f32 %v646, %v698
    %v715 = vadd.f32 %v647, %v699
    %v716 = vadd.f32 %v648, %v700
    %v717 = vld [vmem:[%s6] sm:$0x1]
    %v718 = vld [vmem:[%s2] sm:$0xff]
    %v719 = vld [vmem:[%s2 + $0x8] sm:$0xff]
    %v720 = vld [vmem:[%s2 + $0x10] sm:$0xff]
    %v721 = vld [vmem:[%s2 + $0x18] sm:$0xff]
    %v722 = vld [vmem:[%s2 + $0x20] sm:$0xff]
    %v723 = vld [vmem:[%s2 + $0x28] sm:$0xff]
    %v724 = vld [vmem:[%s2 + $0x30] sm:$0xff]
    %v725 = vld [vmem:[%s2 + $0x38] sm:$0xff]
    %v726 = vld [vmem:[%s2 + $0x40] sm:$0xff]
    %v727 = vld [vmem:[%s2 + $0x48] sm:$0xff]
    %v728 = vld [vmem:[%s2 + $0x50] sm:$0xff]
    %v729 = vld [vmem:[%s2 + $0x58] sm:$0xff]
    %v730 = vld [vmem:[%s2 + $0x60] sm:$0xff]
    %v731 = vld [vmem:[%s2 + $0x68] sm:$0xff]
    %v732 = vld [vmem:[%s2 + $0x70] sm:$0xff]
    %v733 = vld [vmem:[%s2 + $0x78] sm:$0xff]
    %735 = vset.pattern.permute.xlu0 0
    %736 = vperm.xlu0 %735, %v718
    %v737 = vpop.permute.xlu0 %736
    %740 = vset.pattern.permute.xlu0 0
    %741 = vperm.xlu0 %740, %v719
    %v742 = vpop.permute.xlu0 %741
    %745 = vset.pattern.permute.xlu0 0
    %746 = vperm.xlu0 %745, %v720
    %v747 = vpop.permute.xlu0 %746
    %750 = vset.pattern.permute.xlu0 0
    %751 = vperm.xlu0 %750, %v721
    %v752 = vpop.permute.xlu0 %751
    %755 = vset.pattern.permute.xlu0 0
    %756 = vperm.xlu0 %755, %v722
    %v757 = vpop.permute.xlu0 %756
    %760 = vset.pattern.permute.xlu0 0
    %761 = vperm.xlu0 %760, %v723
    %v762 = vpop.permute.xlu0 %761
    %765 = vset.pattern.permute.xlu0 0
    %766 = vperm.xlu0 %765, %v724
    %v767 = vpop.permute.xlu0 %766
    %770 = vset.pattern.permute.xlu0 0
    %771 = vperm.xlu0 %770, %v725
    %v772 = vpop.permute.xlu0 %771
    %775 = vset.pattern.permute.xlu0 0
    %776 = vperm.xlu0 %775, %v726
    %v777 = vpop.permute.xlu0 %776
    %780 = vset.pattern.permute.xlu0 0
    %781 = vperm.xlu0 %780, %v727
    %v782 = vpop.permute.xlu0 %781
    %785 = vset.pattern.permute.xlu0 0
    %786 = vperm.xlu0 %785, %v728
    %v787 = vpop.permute.xlu0 %786
    %790 = vset.pattern.permute.xlu0 0
    %791 = vperm.xlu0 %790, %v729
    %v792 = vpop.permute.xlu0 %791
    %795 = vset.pattern.permute.xlu0 0
    %796 = vperm.xlu0 %795, %v730
    %v797 = vpop.permute.xlu0 %796
    %800 = vset.pattern.permute.xlu0 0
    %801 = vperm.xlu0 %800, %v731
    %v802 = vpop.permute.xlu0 %801
    %805 = vset.pattern.permute.xlu0 0
    %806 = vperm.xlu0 %805, %v732
    %v807 = vpop.permute.xlu0 %806
    %810 = vset.pattern.permute.xlu0 0
    %811 = vperm.xlu0 %810, %v733
    %v812 = vpop.permute.xlu0 %811
    %v814 = vmul.f32 %v701, %v737
    %v815 = vmul.f32 %v702, %v742
    %v816 = vmul.f32 %v703, %v747
    %v817 = vmul.f32 %v704, %v752
    %v818 = vmul.f32 %v705, %v757
    %v819 = vmul.f32 %v706, %v762
    %v820 = vmul.f32 %v707, %v767
    %v821 = vmul.f32 %v708, %v772
    %v822 = vmul.f32 %v709, %v777
    %v823 = vmul.f32 %v710, %v782
    %v824 = vmul.f32 %v711, %v787
    %v825 = vmul.f32 %v712, %v792
    %v826 = vmul.f32 %v713, %v797
    %v827 = vmul.f32 %v714, %v802
    %v828 = vmul.f32 %v715, %v807
    %v829 = vmul.f32 %v716, %v812
    %v830 = vadd.f32 %v814, %v815
    %v831 = vadd.f32 %v830, %v816
    %v832 = vadd.f32 %v831, %v817
    %v833 = vadd.f32 %v832, %v818
    %v834 = vadd.f32 %v833, %v819
    %v835 = vadd.f32 %v834, %v820
    %v836 = vadd.f32 %v835, %v821
    %v837 = vadd.f32 %v836, %v822
    %v838 = vadd.f32 %v837, %v823
    %v839 = vadd.f32 %v838, %v824
    %v840 = vadd.f32 %v839, %v825
    %v841 = vadd.f32 %v840, %v826
    %v842 = vadd.f32 %v841, %v827
    %v843 = vadd.f32 %v842, %v828
    %v844 = vadd.f32 %v843, %v829
    %v845 = vrot.slane %v844, 4
    %v846 = vadd.f32 %v844, %v845
    %v847 = vrot.slane %v846, 2
    %v848 = vadd.f32 %v846, %v847
    %v849 = vrot.slane %v848, 1
    %v850 = vadd.f32 %v848, %v849
    %v851 = vadd.f32 %v717, %v850
    %852 = vst [vmem:[%s6] sm:$0x1] %v851
    // Predicated region
    $region38: #{_easymkl_pallas.1} parent=1 // pred_check
      %p853 = pneg %p49
    $region39: #{_easymkl_pallas.1} parent=1 // pred_check_branch
      %855 = sbr.rel (%p853) target = $region41
    $region40: #{_easymkl_pallas.1} parent=1 // pred_region
      %v856 = vld [vmem:[%s6] sm:$0x1]
      %s857 = sld [smem:[#allocation2]]
      %v858 = vstv %s857
      %v859 = vadd.f32 %v856, %v858
      %v860 = vmax.f32 %v859, -1.0
      %v861 = vmin.f32 %v860, 1.0
      %862 = vst [vmem:[%s6] sm:$0x1] %v861
    $region41: #{_easymkl_pallas.1} parent=1 // pred_fallthru
      _
    // Predicated region
    $region42: #{_easymkl_pallas.1} parent=1 // pred_check
      _
    $region43: #{_easymkl_pallas.1} parent=1 // pred_check_branch
      %864 = sbr.rel (0) target = $region45
    $region44: #{_easymkl_pallas.1} parent=1 // pred_region
      _
    $region45: #{_easymkl_pallas.1} parent=1 // pred_fallthru
      _
    // Predicated region
    $region46: #{_easymkl_pallas.1} parent=1 // pred_check
      _
    $region47: #{_easymkl_pallas.1} parent=1 // pred_check_branch
      %866 = sbr.rel (0) target = $region49
    $region48: #{_easymkl_pallas.1} parent=1 // pred_region
      _
    $region49: #{_easymkl_pallas.1} parent=1 // pred_fallthru
      _
    %867 = vsyncpa [#allocation4], 1
    %868 = vsyncpa [#allocation6], 1

</llo_original>
